<compile_context>
chip_gen: v6e
topology: v6e:2x2x1
jax: 0.10.0
libtpu: 0.0.40
codegen_flags: <defaults>
</compile_context>

<pallas_src>
import jax
import jax.numpy as jnp
from jax.experimental import pallas as pl
from jax.experimental.pallas import tpu as pltpu

IN_DIM = 28 * 28   # 784
HID_DIM = 28
_MAX_TB = 1024     # batch-tile rows: 1024x784xf32 = 3.1 MiB/tile -> ~12.5 MiB
                   # double-buffered in+out, safely under the 32 MiB scoped
                   # VMEM default on v5e/v6e/v7x.


def _round_up(n, m):
    return ((n + m - 1) // m) * m


def _ae_kernel(x_ref, we_ref, wd_ref, bd_ref, o_ref):
    # x_ref:  (TB, 784)   batch tile
    # we_ref: (784, 28)   encoder weight, (in, out) layout
    # wd_ref: (28, 784)   decoder weight, (in, out) layout
    # bd_ref: (1, 784)    folded bias:  b_enc @ Wd + b_dec
    # o_ref:  (TB, 784)
    x = x_ref[...]
    z = jnp.dot(x, we_ref[...], preferred_element_type=jnp.float32)
    out = jnp.dot(z, wd_ref[...], preferred_element_type=jnp.float32) + bd_ref[...]
    o_ref[...] = out.astype(o_ref.dtype)


def prepare_params(w_enc, b_enc, w_dec, b_dec):
    """One-time param prep (hoisted out of the forward pass).

    w_enc: (28, 784)  PyTorch layout (out_features, in_features)
    b_enc: (28,)
    w_dec: (784, 28)
    b_dec: (784,)
    Returns (we, wd, bd_fold) with we=(784,28), wd=(28,784), bd_fold=(1,784).
    """
    we = jnp.transpose(w_enc).astype(jnp.float32)          # (784, 28)
    wd = jnp.transpose(w_dec).astype(jnp.float32)          # (28, 784)
    # No nonlinearity between the two Linears, so fold the encoder bias into
    # the decoder bias: out = (x @ We) @ Wd + (b_enc @ Wd + b_dec).
    bd_fold = b_enc.astype(jnp.float32) @ wd + b_dec.astype(jnp.float32)
    return we, wd, bd_fold.reshape(1, IN_DIM)


def ae_forward(x_nchw, we, wd, bd_fold):
    """Forward pass. x_nchw: (B, 1, 28, 28) f32 -> (B, 1, 28, 28) f32."""
    B = x_nchw.shape[0]
    x2d = x_nchw.reshape(B, IN_DIM).astype(jnp.float32)

    # Batch tile: full (padded) batch if small, else _MAX_TB rows per step.
    tb = min(_MAX_TB, _round_up(B, 8))
    b_pad = _round_up(B, tb)
    if b_pad != B:
        x2d = jnp.pad(x2d, ((0, b_pad - B), (0, 0)))

    grid = (b_pad // tb,)

    cost = pl.CostEstimate(
        flops=4 * b_pad * IN_DIM * HID_DIM,          # two matmuls
        transcendentals=0,
        bytes_accessed=4 * (2 * b_pad * IN_DIM       # x read + out write
                            + 2 * IN_DIM * HID_DIM   # both weights
                            + IN_DIM),               # folded bias
    )

    out2d = pl.pallas_call(
        _ae_kernel,
        out_shape=jax.ShapeDtypeStruct((b_pad, IN_DIM), jnp.float32),
        grid=grid,
        in_specs=[
            pl.BlockSpec((tb, IN_DIM), lambda i: (i, 0)),        # x: tiled
            pl.BlockSpec((IN_DIM, HID_DIM), lambda i: (0, 0)),   # We: resident
            pl.BlockSpec((HID_DIM, IN_DIM), lambda i: (0, 0)),   # Wd: resident
            pl.BlockSpec((1, IN_DIM), lambda i: (0, 0)),         # bias: resident
        ],
        out_specs=pl.BlockSpec((tb, IN_DIM), lambda i: (i, 0)),
        compiler_params=pltpu.CompilerParams(
            dimension_semantics=("parallel",)),
        cost_estimate=cost,
    )(x2d, we, wd, bd_fold)

    return out2d[:B].reshape(B, 1, 28, 28)


def init_params(key):
    """PyTorch nn.Linear-style init: U(-k, k), k = 1/sqrt(fan_in)."""
    k1, k2, k3, k4 = jax.random.split(key, 4)
    k_enc = 1.0 / jnp.sqrt(jnp.float32(IN_DIM))
    k_dec = 1.0 / jnp.sqrt(jnp.float32(HID_DIM))
    w_enc = jax.random.uniform(k1, (HID_DIM, IN_DIM), jnp.float32, -k_enc, k_enc)
    b_enc = jax.random.uniform(k2, (HID_DIM,), jnp.float32, -k_enc, k_enc)
    w_dec = jax.random.uniform(k3, (IN_DIM, HID_DIM), jnp.float32, -k_dec, k_dec)
    b_dec = jax.random.uniform(k4, (IN_DIM,), jnp.float32, -k_dec, k_dec)
    return w_enc, b_enc, w_dec, b_dec


if __name__ == "__main__":
    key = jax.random.PRNGKey(0)
    k_params, k_x = jax.random.split(key)
    w_enc, b_enc, w_dec, b_dec = init_params(k_params)

    # One-time parameter prep (transpose / cast / bias fold).
    we, wd, bd_fold = prepare_params(w_enc, b_enc, w_dec, b_dec)

    # Small MNIST-like batch: (B, 1, 28, 28)
    B = 2
    x = jax.random.uniform(k_x, (B, 1, 28, 28), jnp.float32)

    out = ae_forward(x, we, wd, bd_fold)
    out = jax.block_until_ready(out)
    assert out.shape == (B, 1, 28, 28), out.shape

    # Pure-JAX reference of the original PyTorch module (unfused biases).
    x2d = x.reshape(B, IN_DIM)
    z_ref = x2d @ w_enc.T + b_enc
    out_ref = (z_ref @ w_dec.T + b_dec).reshape(B, 1, 28, 28)
    assert jnp.allclose(out, out_ref, atol=1e-4, rtol=1e-4)

    print("KERNEL_OK")
</pallas_src>

<mosaic_0001>
module attributes {stable_mosaic.version = 11 : i64} {
  func.func @_ae_kernel(%arg0: i32, %arg1: memref<8x784xf32, #tpu.memory_space<vmem>>, %arg2: memref<784x28xf32, #tpu.memory_space<vmem>>, %arg3: memref<28x784xf32, #tpu.memory_space<vmem>>, %arg4: memref<1x784xf32, #tpu.memory_space<vmem>>, %arg5: memref<8x784xf32, #tpu.memory_space<vmem>>) attributes {dimension_semantics = [#tpu.dimension_semantics<parallel>], iteration_bounds = array<i64: 1>, scalar_prefetch = 0 : i64, scratch_operands = 0 : i64, tpu.core_type = #tpu.core_type<tc>, window_params = [{transform_indices = @transform_0, window_bounds = array<i64: 8, 784>}, {pipeline_mode = #tpu.pipeline_mode<synchronous>, transform_indices = @transform_1, window_bounds = array<i64: 784, 28>}, {pipeline_mode = #tpu.pipeline_mode<synchronous>, transform_indices = @transform_2, window_bounds = array<i64: 28, 784>}, {pipeline_mode = #tpu.pipeline_mode<synchronous>, transform_indices = @transform_3, window_bounds = array<i64: 1, 784>}, {transform_indices = @transform_4, window_bounds = array<i64: 8, 784>}]} {
    %c0 = arith.constant 0 : index
    %c0_0 = arith.constant 0 : index
    %0 = vector.load %arg1[%c0, %c0_0] : memref<8x784xf32, #tpu.memory_space<vmem>>, vector<8x784xf32>
    %c0_1 = arith.constant 0 : index
    %c0_2 = arith.constant 0 : index
    %1 = vector.load %arg2[%c0_1, %c0_2] : memref<784x28xf32, #tpu.memory_space<vmem>>, vector<784x28xf32>
    %cst = arith.constant dense<0.000000e+00> : vector<8x28xf32>
    %2 = tpu.matmul %0, %1, %cst {dimension_numbers = #tpu.dot_dimension_numbers<[1], [0], [0], [1], [0, 0, 1, 1], [], []>} : vector<8x784xf32>, vector<784x28xf32>, vector<8x28xf32> -> vector<8x28xf32>
    %c0_3 = arith.constant 0 : index
    %c0_4 = arith.constant 0 : index
    %3 = vector.load %arg3[%c0_3, %c0_4] : memref<28x784xf32, #tpu.memory_space<vmem>>, vector<28x784xf32>
    %cst_5 = arith.constant dense<0.000000e+00> : vector<8x784xf32>
    %4 = tpu.matmul %2, %3, %cst_5 {dimension_numbers = #tpu.dot_dimension_numbers<[1], [0], [0], [1], [0, 0, 1, 1], [], []>} : vector<8x28xf32>, vector<28x784xf32>, vector<8x784xf32> -> vector<8x784xf32>
    %c0_6 = arith.constant 0 : index
    %c0_7 = arith.constant 0 : index
    %5 = vector.load %arg4[%c0_6, %c0_7] : memref<1x784xf32, #tpu.memory_space<vmem>>, vector<1x784xf32>
    %6 = vector.broadcast %5 : vector<1x784xf32> to vector<8x784xf32>
    %7 = arith.addf %4, %6 : vector<8x784xf32>
    %c0_8 = arith.constant 0 : index
    %c0_9 = arith.constant 0 : index
    %8 = vector.load %arg5[%c0_8, %c0_9] : memref<8x784xf32, #tpu.memory_space<vmem>>, vector<8x784xf32>
    tpu.vector_store %arg5[%c0_8, %c0_9], %7 {strides = array<i32>} : memref<8x784xf32, #tpu.memory_space<vmem>>, vector<8x784xf32>,
    return
  }
  func.func @transform_0(%arg0: i32) -> (i32, i32) {
    %c0_i32 = arith.constant 0 : i32
    %c0_i32_0 = arith.constant 0 : i32
    return %arg0, %c0_i32 : i32, i32
  }
  func.func @transform_1(%arg0: i32) -> (i32, i32) {
    %c0_i32 = arith.constant 0 : i32
    %c0_i32_0 = arith.constant 0 : i32
    %c0_i32_1 = arith.constant 0 : i32
    return %c0_i32, %c0_i32_0 : i32, i32
  }
  func.func @transform_2(%arg0: i32) -> (i32, i32) {
    %c0_i32 = arith.constant 0 : i32
    %c0_i32_0 = arith.constant 0 : i32
    %c0_i32_1 = arith.constant 0 : i32
    return %c0_i32, %c0_i32_0 : i32, i32
  }
  func.func @transform_3(%arg0: i32) -> (i32, i32) {
    %c0_i32 = arith.constant 0 : i32
    %c0_i32_0 = arith.constant 0 : i32
    %c0_i32_1 = arith.constant 0 : i32
    return %c0_i32, %c0_i32_0 : i32, i32
  }
  func.func @transform_4(%arg0: i32) -> (i32, i32) {
    %c0_i32 = arith.constant 0 : i32
    %c0_i32_0 = arith.constant 0 : i32
    return %arg0, %c0_i32 : i32, i32
  }
}

</mosaic_0001>

<llo_original>
// kernel: tpu_custom_call.1
$region0: #{tpu_custom_call.1}
  #allocation0 [shape = 'u32[]', space=smem, size = 0x4, offset = 0x4, fixed_abs, tag = 'smem constant byte address 0x4 - core index']
  #allocation1 [shape = 'u32[144,128]{1,0:T(1,128)}', space=vmem, size = 0x12000, scoped, tag = 'internal scratch']
  %s0 = inlined_call_operand.vmem [shape: f32[8,784], index: 0, kind: input, shape index: {}]
  %s1 = inlined_call_operand.vmem [shape: f32[784,28], index: 1, kind: input, shape index: {}]
  %s2 = inlined_call_operand.vmem [shape: f32[28,784], index: 2, kind: input, shape index: {}]
  %s3 = inlined_call_operand.vmem [shape: f32[1,784], index: 3, kind: input, shape index: {}]
  %s4 = inlined_call_operand.hbm [shape: f32[8,784], index: 4, kind: output, shape index: {}]
  %s5 = sld [smem:[#allocation0]]
  $region26: #{tpu_custom_call.1} parent=0
    _
  %s7 = ssub.s32 1, %s5
  %s8 = scalar_select 0, %s7, %s5
  $region1: #{tpu_custom_call.1} parent=0
    #allocation2 [shape = 'u8[28672]{0}', space=vmem, size = 0x7000, scoped, tag = 'output window, operand 0, single buffered']
    #allocation3 [shape = 's32[1]{0}', space=sflag, size = 0x4, scoped, tag = 'scoped memory for tpu_custom_call.1']
    %9 = vsyncpa [#allocation3], 0
    // Predicated region
    $region2: #{tpu_custom_call.1} parent=1 // pred_check
      _
    $region3: #{tpu_custom_call.1} parent=1 // pred_check_branch
      %11 = sbr.rel (0) target = $region5
    $region4: #{tpu_custom_call.1} parent=1 // pred_region
      _
    $region5: #{tpu_custom_call.1} parent=1 // pred_fallthru
      _
    // Predicated region
    $region6: #{tpu_custom_call.1} parent=1 // pred_check
      _
    $region7: #{tpu_custom_call.1} parent=1 // pred_check_branch
      %13 = sbr.rel (0) target = $region9
    $region8: #{tpu_custom_call.1} parent=1 // pred_region
      _
    $region9: #{tpu_custom_call.1} parent=1 // pred_fallthru
      _
    // Predicated region
    $region10: #{tpu_custom_call.1} parent=1 // pred_check
      _
    $region11: #{tpu_custom_call.1} parent=1 // pred_check_branch
      %15 = sbr.rel (0) target = $region13
    $region12: #{tpu_custom_call.1} parent=1 // pred_region
      _
    $region13: #{tpu_custom_call.1} parent=1 // pred_fallthru
      _
    // Predicated region
    $region14: #{tpu_custom_call.1} parent=1 // pred_check
      _
    $region15: #{tpu_custom_call.1} parent=1 // pred_check_branch
      %17 = sbr.rel (0) target = $region17
    $region16: #{tpu_custom_call.1} parent=1 // pred_region
      _
    $region17: #{tpu_custom_call.1} parent=1 // pred_fallthru
      _
    %v18 = vld [vmem:[%s0] sm:$0xff]
    %v19 = vld [vmem:[%s0 + $0x8] sm:$0xff]
    %v20 = vld [vmem:[%s0 + $0x10] sm:$0xff]
    %v21 = vld [vmem:[%s0 + $0x18] sm:$0xff]
    %v22 = vld [vmem:[%s0 + $0x20] sm:$0xff]
    %v23 = vld [vmem:[%s0 + $0x28] sm:$0xff]
    %v24 = vld [vmem:[%s0 + $0x30] sm:$0xff]
    %v25 = vld [vmem:[%s1] sm:$0xff]
    %v26 = vld [vmem:[%s1 + $0x8] sm:$0xff]
    %v27 = vld [vmem:[%s1 + $0x10] sm:$0xff]
    %v28 = vld [vmem:[%s1 + $0x18] sm:$0xff]
    %v29 = vld [vmem:[%s1 + $0x20] sm:$0xff]
    %v30 = vld [vmem:[%s1 + $0x28] sm:$0xff]
    %v31 = vld [vmem:[%s1 + $0x30] sm:$0xff]
    %v32 = vld [vmem:[%s1 + $0x38] sm:$0xff]
    %v33 = vld [vmem:[%s1 + $0x40] sm:$0xff]
    %v34 = vld [vmem:[%s1 + $0x48] sm:$0xff]
    %v35 = vld [vmem:[%s1 + $0x50] sm:$0xff]
    %v36 = vld [vmem:[%s1 + $0x58] sm:$0xff]
    %v37 = vld [vmem:[%s1 + $0x60] sm:$0xff]
    %v38 = vld [vmem:[%s1 + $0x68] sm:$0xff]
    %v39 = vld [vmem:[%s1 + $0x70] sm:$0xff]
    %v40 = vld [vmem:[%s1 + $0x78] sm:$0xff]
    %v41 = vld [vmem:[%s1 + $0x80] sm:$0xff]
    %v42 = vld [vmem:[%s1 + $0x88] sm:$0xff]
    %v43 = vld [vmem:[%s1 + $0x90] sm:$0xff]
    %v44 = vld [vmem:[%s1 + $0x98] sm:$0xff]
    %v45 = vld [vmem:[%s1 + $0xa0] sm:$0xff]
    %v46 = vld [vmem:[%s1 + $0xa8] sm:$0xff]
    %v47 = vld [vmem:[%s1 + $0xb0] sm:$0xff]
    %v48 = vld [vmem:[%s1 + $0xb8] sm:$0xff]
    %v49 = vld [vmem:[%s1 + $0xc0] sm:$0xff]
    %v50 = vld [vmem:[%s1 + $0xc8] sm:$0xff]
    %v51 = vld [vmem:[%s1 + $0xd0] sm:$0xff]
    %v52 = vld [vmem:[%s1 + $0xd8] sm:$0xff]
    %v53 = vld [vmem:[%s1 + $0xe0] sm:$0xff]
    %v54 = vld [vmem:[%s1 + $0xe8] sm:$0xff]
    %v55 = vld [vmem:[%s1 + $0xf0] sm:$0xff]
    %v56 = vld [vmem:[%s1 + $0xf8] sm:$0xff]
    %v57 = vld [vmem:[%s1 + $0x100] sm:$0xff]
    %v58 = vld [vmem:[%s1 + $0x108] sm:$0xff]
    %v59 = vld [vmem:[%s1 + $0x110] sm:$0xff]
    %v60 = vld [vmem:[%s1 + $0x118] sm:$0xff]
    %v61 = vld [vmem:[%s1 + $0x120] sm:$0xff]
    %v62 = vld [vmem:[%s1 + $0x128] sm:$0xff]
    %v63 = vld [vmem:[%s1 + $0x130] sm:$0xff]
    %v64 = vld [vmem:[%s1 + $0x138] sm:$0xff]
    %v65 = vld [vmem:[%s1 + $0x140] sm:$0xff]
    %v66 = vld [vmem:[%s1 + $0x148] sm:$0xff]
    %v67 = vld [vmem:[%s1 + $0x150] sm:$0xff]
    %v68 = vld [vmem:[%s1 + $0x158] sm:$0xff]
    %v69 = vld [vmem:[%s1 + $0x160] sm:$0xff]
    %v70 = vld [vmem:[%s1 + $0x168] sm:$0xff]
    %v71 = vld [vmem:[%s1 + $0x170] sm:$0xff]
    %v72 = vld [vmem:[%s1 + $0x178] sm:$0xff]
    %v73 = vld [vmem:[%s1 + $0x180] sm:$0xff]
    %v74 = vld [vmem:[%s1 + $0x188] sm:$0xff]
    %v75 = vld [vmem:[%s1 + $0x190] sm:$0xff]
    %v76 = vld [vmem:[%s1 + $0x198] sm:$0xff]
    %v77 = vld [vmem:[%s1 + $0x1a0] sm:$0xff]
    %v78 = vld [vmem:[%s1 + $0x1a8] sm:$0xff]
    %v79 = vld [vmem:[%s1 + $0x1b0] sm:$0xff]
    %v80 = vld [vmem:[%s1 + $0x1b8] sm:$0xff]
    %v81 = vld [vmem:[%s1 + $0x1c0] sm:$0xff]
    %v82 = vld [vmem:[%s1 + $0x1c8] sm:$0xff]
    %v83 = vld [vmem:[%s1 + $0x1d0] sm:$0xff]
    %v84 = vld [vmem:[%s1 + $0x1d8] sm:$0xff]
    %v85 = vld [vmem:[%s1 + $0x1e0] sm:$0xff]
    %v86 = vld [vmem:[%s1 + $0x1e8] sm:$0xff]
    %v87 = vld [vmem:[%s1 + $0x1f0] sm:$0xff]
    %v88 = vld [vmem:[%s1 + $0x1f8] sm:$0xff]
    %v89 = vld [vmem:[%s1 + $0x200] sm:$0xff]
    %v90 = vld [vmem:[%s1 + $0x208] sm:$0xff]
    %v91 = vld [vmem:[%s1 + $0x210] sm:$0xff]
    %v92 = vld [vmem:[%s1 + $0x218] sm:$0xff]
    %v93 = vld [vmem:[%s1 + $0x220] sm:$0xff]
    %v94 = vld [vmem:[%s1 + $0x228] sm:$0xff]
    %v95 = vld [vmem:[%s1 + $0x230] sm:$0xff]
    %v96 = vld [vmem:[%s1 + $0x238] sm:$0xff]
    %v97 = vld [vmem:[%s1 + $0x240] sm:$0xff]
    %v98 = vld [vmem:[%s1 + $0x248] sm:$0xff]
    %v99 = vld [vmem:[%s1 + $0x250] sm:$0xff]
    %v100 = vld [vmem:[%s1 + $0x258] sm:$0xff]
    %v101 = vld [vmem:[%s1 + $0x260] sm:$0xff]
    %v102 = vld [vmem:[%s1 + $0x268] sm:$0xff]
    %v103 = vld [vmem:[%s1 + $0x270] sm:$0xff]
    %v104 = vld [vmem:[%s1 + $0x278] sm:$0xff]
    %v105 = vld [vmem:[%s1 + $0x280] sm:$0xff]
    %v106 = vld [vmem:[%s1 + $0x288] sm:$0xff]
    %v107 = vld [vmem:[%s1 + $0x290] sm:$0xff]
    %v108 = vld [vmem:[%s1 + $0x298] sm:$0xff]
    %v109 = vld [vmem:[%s1 + $0x2a0] sm:$0xff]
    %v110 = vld [vmem:[%s1 + $0x2a8] sm:$0xff]
    %v111 = vld [vmem:[%s1 + $0x2b0] sm:$0xff]
    %v112 = vld [vmem:[%s1 + $0x2b8] sm:$0xff]
    %v113 = vld [vmem:[%s1 + $0x2c0] sm:$0xff]
    %v114 = vld [vmem:[%s1 + $0x2c8] sm:$0xff]
    %v115 = vld [vmem:[%s1 + $0x2d0] sm:$0xff]
    %v116 = vld [vmem:[%s1 + $0x2d8] sm:$0xff]
    %v117 = vld [vmem:[%s1 + $0x2e0] sm:$0xff]
    %v118 = vld [vmem:[%s1 + $0x2e8] sm:$0xff]
    %v119 = vld [vmem:[%s1 + $0x2f0] sm:$0xff]
    %v120 = vld [vmem:[%s1 + $0x2f8] sm:$0xff]
    %v121 = vld [vmem:[%s1 + $0x300] sm:$0xff]
    %v122 = vld [vmem:[%s1 + $0x308] sm:$0xff]
    %vm123 = vcmask 130048
    %v125 = vsel %vm123, %v24, 0
    %127 = vmatprep.subr.mxu0 0.0
    %128 = vmatpush1.msra.mxu0 %v40
    %129 = vmatprep.subr.mxu0 0.0
    %130 = vmatpush1.msra.mxu0 %v39
    %131 = vmatprep.subr.mxu0 0.0
    %132 = vmatpush1.msra.mxu0 %v38
    %133 = vmatprep.subr.mxu0 0.0
    %134 = vmatpush1.msra.mxu0 %v37
    %135 = vmatprep.subr.mxu0 0.0
    %136 = vmatpush1.msra.mxu0 %v36
    %137 = vmatprep.subr.mxu0 0.0
    %138 = vmatpush1.msra.mxu0 %v35
    %139 = vmatprep.subr.mxu0 0.0
    %140 = vmatpush1.msra.mxu0 %v34
    %141 = vmatprep.subr.mxu0 0.0
    %142 = vmatpush1.msra.mxu0 %v33
    %143 = vmatprep.subr.mxu0 0.0
    %144 = vmatpush1.msra.mxu0 %v32
    %145 = vmatprep.subr.mxu0 0.0
    %146 = vmatpush1.msra.mxu0 %v31
    %147 = vmatprep.subr.mxu0 0.0
    %148 = vmatpush1.msra.mxu0 %v30
    %149 = vmatprep.subr.mxu0 0.0
    %150 = vmatpush1.msra.mxu0 %v29
    %151 = vmatprep.subr.mxu0 0.0
    %152 = vmatpush1.msra.mxu0 %v28
    %153 = vmatprep.subr.mxu0 0.0
    %154 = vmatpush1.msra.mxu0 %v27
    %155 = vmatprep.subr.mxu0 0.0
    %156 = vmatpush1.msra.mxu0 %v26
    %157 = vmatprep.subr.mxu0 0.0
    %158 = vmatpush1.msra.mxu0 %v25
    %159 = vmatprep.subr.mxu0 0.0
    %160 = vmatpush2.msra.mxu0 %v56
    %161 = vmatprep.subr.mxu0 0.0
    %162 = vmatpush2.msra.mxu0 %v55
    %163 = vmatprep.subr.mxu0 0.0
    %164 = vmatpush2.msra.mxu0 %v54
    %165 = vmatprep.subr.mxu0 0.0
    %166 = vmatpush2.msra.mxu0 %v53
    %167 = vmatprep.subr.mxu0 0.0
    %168 = vmatpush2.msra.mxu0 %v52
    %169 = vmatprep.subr.mxu0 0.0
    %170 = vmatpush2.msra.mxu0 %v51
    %171 = vmatprep.subr.mxu0 0.0
    %172 = vmatpush2.msra.mxu0 %v50
    %173 = vmatprep.subr.mxu0 0.0
    %174 = vmatpush2.msra.mxu0 %v49
    %175 = vmatprep.subr.mxu0 0.0
    %176 = vmatpush2.msra.mxu0 %v48
    %177 = vmatprep.subr.mxu0 0.0
    %178 = vmatpush2.msra.mxu0 %v47
    %179 = vmatprep.subr.mxu0 0.0
    %180 = vmatpush2.msra.mxu0 %v46
    %181 = vmatprep.subr.mxu0 0.0
    %182 = vmatpush2.msra.mxu0 %v45
    %183 = vmatprep.subr.mxu0 0.0
    %184 = vmatpush2.msra.mxu0 %v44
    %185 = vmatprep.subr.mxu0 0.0
    %186 = vmatpush2.msra.mxu0 %v43
    %187 = vmatprep.subr.mxu0 0.0
    %188 = vmatpush2.msra.mxu0 %v42
    %189 = vmatprep.subr.mxu0 0.0
    %190 = vmatpush2.msra.mxu0 %v41
    %191 = vmatprep.mubr.f32.mxu0 %v19
    %192 = vmatmul.mubr.f32.gmra.mxu0 %v18
    %v193 = vpop.f32.mrf.mxu0
    %v194 = vadd.f32 0.0, %v193
    %v195 = vpop.f32.mrf.mxu0
    %196 = vdwg.mxu0
    %197 = vmatprep.subr.mxu0 0.0
    %198 = vmatpush1.msra.mxu0 %v72
    %199 = vmatprep.subr.mxu0 0.0
    %200 = vmatpush1.msra.mxu0 %v71
    %201 = vmatprep.subr.mxu0 0.0
    %202 = vmatpush1.msra.mxu0 %v70
    %203 = vmatprep.subr.mxu0 0.0
    %204 = vmatpush1.msra.mxu0 %v69
    %205 = vmatprep.subr.mxu0 0.0
    %206 = vmatpush1.msra.mxu0 %v68
    %207 = vmatprep.subr.mxu0 0.0
    %208 = vmatpush1.msra.mxu0 %v67
    %209 = vmatprep.subr.mxu0 0.0
    %210 = vmatpush1.msra.mxu0 %v66
    %211 = vmatprep.subr.mxu0 0.0
    %212 = vmatpush1.msra.mxu0 %v65
    %213 = vmatprep.subr.mxu0 0.0
    %214 = vmatpush1.msra.mxu0 %v64
    %215 = vmatprep.subr.mxu0 0.0
    %216 = vmatpush1.msra.mxu0 %v63
    %217 = vmatprep.subr.mxu0 0.0
    %218 = vmatpush1.msra.mxu0 %v62
    %219 = vmatprep.subr.mxu0 0.0
    %220 = vmatpush1.msra.mxu0 %v61
    %221 = vmatprep.subr.mxu0 0.0
    %222 = vmatpush1.msra.mxu0 %v60
    %223 = vmatprep.subr.mxu0 0.0
    %224 = vmatpush1.msra.mxu0 %v59
    %225 = vmatprep.subr.mxu0 0.0
    %226 = vmatpush1.msra.mxu0 %v58
    %227 = vmatprep.subr.mxu0 0.0
    %228 = vmatpush1.msra.mxu0 %v57
    %229 = vmatprep.subr.mxu0 0.0
    %230 = vmatpush2.msra.mxu0 %v88
    %231 = vmatprep.subr.mxu0 0.0
    %232 = vmatpush2.msra.mxu0 %v87
    %233 = vmatprep.subr.mxu0 0.0
    %234 = vmatpush2.msra.mxu0 %v86
    %235 = vmatprep.subr.mxu0 0.0
    %236 = vmatpush2.msra.mxu0 %v85
    %237 = vmatprep.subr.mxu0 0.0
    %238 = vmatpush2.msra.mxu0 %v84
    %239 = vmatprep.subr.mxu0 0.0
    %240 = vmatpush2.msra.mxu0 %v83
    %241 = vmatprep.subr.mxu0 0.0
    %242 = vmatpush2.msra.mxu0 %v82
    %243 = vmatprep.subr.mxu0 0.0
    %244 = vmatpush2.msra.mxu0 %v81
    %245 = vmatprep.subr.mxu0 0.0
    %246 = vmatpush2.msra.mxu0 %v80
    %247 = vmatprep.subr.mxu0 0.0
    %248 = vmatpush2.msra.mxu0 %v79
    %249 = vmatprep.subr.mxu0 0.0
    %250 = vmatpush2.msra.mxu0 %v78
    %251 = vmatprep.subr.mxu0 0.0
    %252 = vmatpush2.msra.mxu0 %v77
    %253 = vmatprep.subr.mxu0 0.0
    %254 = vmatpush2.msra.mxu0 %v76
    %255 = vmatprep.subr.mxu0 0.0
    %256 = vmatpush2.msra.mxu0 %v75
    %257 = vmatprep.subr.mxu0 0.0
    %258 = vmatpush2.msra.mxu0 %v74
    %259 = vmatprep.subr.mxu0 0.0
    %260 = vmatpush2.msra.mxu0 %v73
    %261 = vmatprep.mubr.f32.mxu0 %v21
    %262 = vmatmul.mubr.f32.gmra.mxu0 %v20
    %v263 = vpop.f32.mrf.mxu0
    %v264 = vadd.f32 %v194, %v263
    %v265 = vpop.f32.mrf.mxu0
    %266 = vdwg.mxu0
    %267 = vmatprep.subr.mxu0 0.0
    %268 = vmatpush1.msra.mxu0 %v104
    %269 = vmatprep.subr.mxu0 0.0
    %270 = vmatpush1.msra.mxu0 %v103
    %271 = vmatprep.subr.mxu0 0.0
    %272 = vmatpush1.msra.mxu0 %v102
    %273 = vmatprep.subr.mxu0 0.0
    %274 = vmatpush1.msra.mxu0 %v101
    %275 = vmatprep.subr.mxu0 0.0
    %276 = vmatpush1.msra.mxu0 %v100
    %277 = vmatprep.subr.mxu0 0.0
    %278 = vmatpush1.msra.mxu0 %v99
    %279 = vmatprep.subr.mxu0 0.0
    %280 = vmatpush1.msra.mxu0 %v98
    %281 = vmatprep.subr.mxu0 0.0
    %282 = vmatpush1.msra.mxu0 %v97
    %283 = vmatprep.subr.mxu0 0.0
    %284 = vmatpush1.msra.mxu0 %v96
    %285 = vmatprep.subr.mxu0 0.0
    %286 = vmatpush1.msra.mxu0 %v95
    %287 = vmatprep.subr.mxu0 0.0
    %288 = vmatpush1.msra.mxu0 %v94
    %289 = vmatprep.subr.mxu0 0.0
    %290 = vmatpush1.msra.mxu0 %v93
    %291 = vmatprep.subr.mxu0 0.0
    %292 = vmatpush1.msra.mxu0 %v92
    %293 = vmatprep.subr.mxu0 0.0
    %294 = vmatpush1.msra.mxu0 %v91
    %295 = vmatprep.subr.mxu0 0.0
    %296 = vmatpush1.msra.mxu0 %v90
    %297 = vmatprep.subr.mxu0 0.0
    %298 = vmatpush1.msra.mxu0 %v89
    %299 = vmatprep.subr.mxu0 0.0
    %300 = vmatpush2.msra.mxu0 %v120
    %301 = vmatprep.subr.mxu0 0.0
    %302 = vmatpush2.msra.mxu0 %v119
    %303 = vmatprep.subr.mxu0 0.0
    %304 = vmatpush2.msra.mxu0 %v118
    %305 = vmatprep.subr.mxu0 0.0
    %306 = vmatpush2.msra.mxu0 %v117
    %307 = vmatprep.subr.mxu0 0.0
    %308 = vmatpush2.msra.mxu0 %v116
    %309 = vmatprep.subr.mxu0 0.0
    %310 = vmatpush2.msra.mxu0 %v115
    %311 = vmatprep.subr.mxu0 0.0
    %312 = vmatpush2.msra.mxu0 %v114
    %313 = vmatprep.subr.mxu0 0.0
    %314 = vmatpush2.msra.mxu0 %v113
    %315 = vmatprep.subr.mxu0 0.0
    %316 = vmatpush2.msra.mxu0 %v112
    %317 = vmatprep.subr.mxu0 0.0
    %318 = vmatpush2.msra.mxu0 %v111
    %319 = vmatprep.subr.mxu0 0.0
    %320 = vmatpush2.msra.mxu0 %v110
    %321 = vmatprep.subr.mxu0 0.0
    %322 = vmatpush2.msra.mxu0 %v109
    %323 = vmatprep.subr.mxu0 0.0
    %324 = vmatpush2.msra.mxu0 %v108
    %325 = vmatprep.subr.mxu0 0.0
    %326 = vmatpush2.msra.mxu0 %v107
    %327 = vmatprep.subr.mxu0 0.0
    %328 = vmatpush2.msra.mxu0 %v106
    %329 = vmatprep.subr.mxu0 0.0
    %330 = vmatpush2.msra.mxu0 %v105
    %331 = vmatprep.mubr.f32.mxu0 %v23
    %332 = vmatmul.mubr.f32.gmra.mxu0 %v22
    %v333 = vpop.f32.mrf.mxu0
    %v334 = vadd.f32 %v264, %v333
    %v335 = vpop.f32.mrf.mxu0
    %336 = vdwg.mxu0
    %337 = vmatprep.subr.mxu0 0.0
    %338 = vmatpush1.msra.mxu0 0.0
    %339 = vmatprep.subr.mxu0 0.0
    %340 = vmatpush1.msra.mxu0 0.0
    %341 = vmatprep.subr.mxu0 0.0
    %342 = vmatpush1.msra.mxu0 0.0
    %343 = vmatprep.subr.mxu0 0.0
    %344 = vmatpush1.msra.mxu0 0.0
    %345 = vmatprep.subr.mxu0 0.0
    %346 = vmatpush1.msra.mxu0 0.0
    %347 = vmatprep.subr.mxu0 0.0
    %348 = vmatpush1.msra.mxu0 0.0
    %349 = vmatprep.subr.mxu0 0.0
    %350 = vmatpush1.msra.mxu0 0.0
    %351 = vmatprep.subr.mxu0 0.0
    %352 = vmatpush1.msra.mxu0 0.0
    %353 = vmatprep.subr.mxu0 0.0
    %354 = vmatpush1.msra.mxu0 0.0
    %355 = vmatprep.subr.mxu0 0.0
    %356 = vmatpush1.msra.mxu0 0.0
    %357 = vmatprep.subr.mxu0 0.0
    %358 = vmatpush1.msra.mxu0 0.0
    %359 = vmatprep.subr.mxu0 0.0
    %360 = vmatpush1.msra.mxu0 0.0
    %361 = vmatprep.subr.mxu0 0.0
    %362 = vmatpush1.msra.mxu0 0.0
    %363 = vmatprep.subr.mxu0 0.0
    %364 = vmatpush1.msra.mxu0 0.0
    %365 = vmatprep.subr.mxu0 0.0
    %366 = vmatpush1.msra.mxu0 %v122
    %367 = vmatprep.subr.mxu0 0.0
    %368 = vmatpush1.msra.mxu0 %v121
    %369 = vmatprep.subr.mxu0 0.0
    %370 = vmatpush2.msra.mxu0 0.0
    %371 = vmatprep.subr.mxu0 0.0
    %372 = vmatpush2.msra.mxu0 0.0
    %373 = vmatprep.subr.mxu0 0.0
    %374 = vmatpush2.msra.mxu0 0.0
    %375 = vmatprep.subr.mxu0 0.0
    %376 = vmatpush2.msra.mxu0 0.0
    %377 = vmatprep.subr.mxu0 0.0
    %378 = vmatpush2.msra.mxu0 0.0
    %379 = vmatprep.subr.mxu0 0.0
    %380 = vmatpush2.msra.mxu0 0.0
    %381 = vmatprep.subr.mxu0 0.0
    %382 = vmatpush2.msra.mxu0 0.0
    %383 = vmatprep.subr.mxu0 0.0
    %384 = vmatpush2.msra.mxu0 0.0
    %385 = vmatprep.subr.mxu0 0.0
    %386 = vmatpush2.msra.mxu0 0.0
    %387 = vmatprep.subr.mxu0 0.0
    %388 = vmatpush2.msra.mxu0 0.0
    %389 = vmatprep.subr.mxu0 0.0
    %390 = vmatpush2.msra.mxu0 0.0
    %391 = vmatprep.subr.mxu0 0.0
    %392 = vmatpush2.msra.mxu0 0.0
    %393 = vmatprep.subr.mxu0 0.0
    %394 = vmatpush2.msra.mxu0 0.0
    %395 = vmatprep.subr.mxu0 0.0
    %396 = vmatpush2.msra.mxu0 0.0
    %397 = vmatprep.subr.mxu0 0.0
    %398 = vmatpush2.msra.mxu0 0.0
    %399 = vmatprep.subr.mxu0 0.0
    %400 = vmatpush2.msra.mxu0 0.0
    %401 = vmatprep.mubr.f32.mxu0 0.0
    %402 = vmatmul.mubr.f32.gmra.mxu0 %v125
    %v403 = vpop.f32.mrf.mxu0
    %v404 = vadd.f32 %v334, %v403
    %v405 = vpop.f32.mrf.mxu0
    %406 = vdwg.mxu0
    %v407 = vld [vmem:[%s2] sm:$0xff]
    %v408 = vld [vmem:[%s2 + $0x8] sm:$0xff]
    %v409 = vld [vmem:[%s2 + $0x10] sm:$0xff]
    %v410 = vld [vmem:[%s2 + $0x18] sm:$0xff]
    %v411 = vld [vmem:[%s2 + $0x20] sm:$0xff]
    %v412 = vld [vmem:[%s2 + $0x28] sm:$0xff]
    %v413 = vld [vmem:[%s2 + $0x30] sm:$0xff]
    %v414 = vld [vmem:[%s2 + $0x38] sm:$0xff]
    %v415 = vld [vmem:[%s2 + $0x40] sm:$0xff]
    %v416 = vld [vmem:[%s2 + $0x48] sm:$0xff]
    %v417 = vld [vmem:[%s2 + $0x50] sm:$0xff]
    %v418 = vld [vmem:[%s2 + $0x58] sm:$0xff]
    %v419 = vld [vmem:[%s2 + $0x60] sm:$0xff]
    %v420 = vld [vmem:[%s2 + $0x68] sm:$0xff]
    %v421 = vld [vmem:[%s2 + $0x70] sm:$0xff]
    %v422 = vld [vmem:[%s2 + $0x78] sm:$0xff]
    %v423 = vld [vmem:[%s2 + $0x80] sm:$0xff]
    %v424 = vld [vmem:[%s2 + $0x88] sm:$0xff]
    %v425 = vld [vmem:[%s2 + $0x90] sm:$0xff]
    %v426 = vld [vmem:[%s2 + $0x98] sm:$0xff]
    %v427 = vld [vmem:[%s2 + $0xa0] sm:$0xff]
    %v428 = vld [vmem:[%s2 + $0xa8] sm:$0xf]
    %v429 = vld [vmem:[%s2 + $0xb0] sm:$0xf]
    %v430 = vld [vmem:[%s2 + $0xb8] sm:$0xf]
    %v431 = vld [vmem:[%s2 + $0xc0] sm:$0xf]
    %v432 = vld [vmem:[%s2 + $0xc8] sm:$0xf]
    %v433 = vld [vmem:[%s2 + $0xd0] sm:$0xf]
    %v434 = vld [vmem:[%s2 + $0xd8] sm:$0xf]
    %v435 = vld [vmem:[%s3] sm:$0x7f]
    %v437 = vlaneseq
    %v438 = vshrl.u32 %v437, 7
    %v439 = vsub.s32 0, %v438
    %v440 = vrot.slane %v435, %v439
    %v441 = vlaneseq
    %v442 = vshrl.u32 %v441, 7
    %v443 = vsub.s32 1, %v442
    %v444 = vrot.slane %v435, %v443
    %v445 = vlaneseq
    %v446 = vshrl.u32 %v445, 7
    %v447 = vsub.s32 2, %v446
    %v448 = vrot.slane %v435, %v447
    %v449 = vlaneseq
    %v450 = vshrl.u32 %v449, 7
    %v451 = vsub.s32 3, %v450
    %v452 = vrot.slane %v435, %v451
    %v453 = vlaneseq
    %v454 = vshrl.u32 %v453, 7
    %v455 = vsub.s32 4, %v454
    %v456 = vrot.slane %v435, %v455
    %v457 = vlaneseq
    %v458 = vshrl.u32 %v457, 7
    %v459 = vsub.s32 5, %v458
    %v460 = vrot.slane %v435, %v459
    %v461 = vlaneseq
    %v462 = vshrl.u32 %v461, 7
    %v463 = vsub.s32 6, %v462
    %v464 = vrot.slane %v435, %v463
    %vm472 = vcmask 228352
    %v474 = vsel %vm472, %v404, 0
    %vm476 = vcmask 1043456
    %v478 = vsel %vm476, %v428, 0
    %v481 = vsel %vm476, %v429, 0
    %v484 = vsel %vm476, %v430, 0
    %v487 = vsel %vm476, %v431, 0
    %v490 = vsel %vm476, %v432, 0
    %v493 = vsel %vm476, %v433, 0
    %v496 = vsel %vm476, %v434, 0
    %498 = vmatprep.subr.mxu0 0.0
    %499 = vmatpush1.msra.mxu0 0.0
    %500 = vmatprep.subr.mxu0 0.0
    %501 = vmatpush1.msra.mxu0 0.0
    %502 = vmatprep.subr.mxu0 0.0
    %503 = vmatpush1.msra.mxu0 0.0
    %504 = vmatprep.subr.mxu0 0.0
    %505 = vmatpush1.msra.mxu0 0.0
    %506 = vmatprep.subr.mxu0 0.0
    %507 = vmatpush1.msra.mxu0 0.0
    %508 = vmatprep.subr.mxu0 0.0
    %509 = vmatpush1.msra.mxu0 0.0
    %510 = vmatprep.subr.mxu0 0.0
    %511 = vmatpush1.msra.mxu0 0.0
    %512 = vmatprep.subr.mxu0 0.0
    %513 = vmatpush1.msra.mxu0 0.0
    %514 = vmatprep.subr.mxu0 0.0
    %515 = vmatpush1.msra.mxu0 0.0
    %516 = vmatprep.subr.mxu0 0.0
    %517 = vmatpush1.msra.mxu0 0.0
    %518 = vmatprep.subr.mxu0 0.0
    %519 = vmatpush1.msra.mxu0 0.0
    %520 = vmatprep.subr.mxu0 0.0
    %521 = vmatpush1.msra.mxu0 0.0
    %522 = vmatprep.subr.mxu0 %v481
    %523 = vmatpush1.msra.mxu0 %v478
    %524 = vmatprep.subr.mxu0 %v422
    %525 = vmatpush1.msra.mxu0 %v421
    %526 = vmatprep.subr.mxu0 %v415
    %527 = vmatpush1.msra.mxu0 %v414
    %528 = vmatprep.subr.mxu0 %v408
    %529 = vmatpush1.msra.mxu0 %v407
    %530 = vmatprep.subr.mxu0 0.0
    %531 = vmatpush2.msra.mxu0 0.0
    %532 = vmatprep.subr.mxu0 0.0
    %533 = vmatpush2.msra.mxu0 0.0
    %534 = vmatprep.subr.mxu0 0.0
    %535 = vmatpush2.msra.mxu0 0.0
    %536 = vmatprep.subr.mxu0 0.0
    %537 = vmatpush2.msra.mxu0 0.0
    %538 = vmatprep.subr.mxu0 0.0
    %539 = vmatpush2.msra.mxu0 0.0
    %540 = vmatprep.subr.mxu0 0.0
    %541 = vmatpush2.msra.mxu0 0.0
    %542 = vmatprep.subr.mxu0 0.0
    %543 = vmatpush2.msra.mxu0 0.0
    %544 = vmatprep.subr.mxu0 0.0
    %545 = vmatpush2.msra.mxu0 0.0
    %546 = vmatprep.subr.mxu0 0.0
    %547 = vmatpush2.msra.mxu0 0.0
    %548 = vmatprep.subr.mxu0 0.0
    %549 = vmatpush2.msra.mxu0 0.0
    %550 = vmatprep.subr.mxu0 0.0
    %551 = vmatpush2.msra.mxu0 0.0
    %552 = vmatprep.subr.mxu0 0.0
    %553 = vmatpush2.msra.mxu0 0.0
    %554 = vmatprep.subr.mxu0 0.0
    %555 = vmatpush2.msra.mxu0 0.0
    %556 = vmatprep.subr.mxu0 0.0
    %557 = vmatpush2.msra.mxu0 0.0
    %558 = vmatprep.subr.mxu0 0.0
    %559 = vmatpush2.msra.mxu0 0.0
    %560 = vmatprep.subr.mxu0 0.0
    %561 = vmatpush2.msra.mxu0 0.0
    %562 = vmatprep.mubr.f32.mxu0 0.0
    %563 = vmatmul.mubr.f32.gmra.mxu0 %v474
    %v564 = vpop.f32.mrf.mxu0
    %v565 = vadd.f32 %v440, %v564
    %v566 = vpop.f32.mrf.mxu0
    %v567 = vadd.f32 %v444, %v566
    %568 = vdwg.mxu0
    %569 = vmatprep.subr.mxu0 0.0
    %570 = vmatpush1.msra.mxu0 0.0
    %571 = vmatprep.subr.mxu0 0.0
    %572 = vmatpush1.msra.mxu0 0.0
    %573 = vmatprep.subr.mxu0 0.0
    %574 = vmatpush1.msra.mxu0 0.0
    %575 = vmatprep.subr.mxu0 0.0
    %576 = vmatpush1.msra.mxu0 0.0
    %577 = vmatprep.subr.mxu0 0.0
    %578 = vmatpush1.msra.mxu0 0.0
    %579 = vmatprep.subr.mxu0 0.0
    %580 = vmatpush1.msra.mxu0 0.0
    %581 = vmatprep.subr.mxu0 0.0
    %582 = vmatpush1.msra.mxu0 0.0
    %583 = vmatprep.subr.mxu0 0.0
    %584 = vmatpush1.msra.mxu0 0.0
    %585 = vmatprep.subr.mxu0 0.0
    %586 = vmatpush1.msra.mxu0 0.0
    %587 = vmatprep.subr.mxu0 0.0
    %588 = vmatpush1.msra.mxu0 0.0
    %589 = vmatprep.subr.mxu0 0.0
    %590 = vmatpush1.msra.mxu0 0.0
    %591 = vmatprep.subr.mxu0 0.0
    %592 = vmatpush1.msra.mxu0 0.0
    %593 = vmatprep.subr.mxu0 %v487
    %594 = vmatpush1.msra.mxu0 %v484
    %595 = vmatprep.subr.mxu0 %v424
    %596 = vmatpush1.msra.mxu0 %v423
    %597 = vmatprep.subr.mxu0 %v417
    %598 = vmatpush1.msra.mxu0 %v416
    %599 = vmatprep.subr.mxu0 %v410
    %600 = vmatpush1.msra.mxu0 %v409
    %601 = vmatprep.subr.mxu0 0.0
    %602 = vmatpush2.msra.mxu0 0.0
    %603 = vmatprep.subr.mxu0 0.0
    %604 = vmatpush2.msra.mxu0 0.0
    %605 = vmatprep.subr.mxu0 0.0
    %606 = vmatpush2.msra.mxu0 0.0
    %607 = vmatprep.subr.mxu0 0.0
    %608 = vmatpush2.msra.mxu0 0.0
    %609 = vmatprep.subr.mxu0 0.0
    %610 = vmatpush2.msra.mxu0 0.0
    %611 = vmatprep.subr.mxu0 0.0
    %612 = vmatpush2.msra.mxu0 0.0
    %613 = vmatprep.subr.mxu0 0.0
    %614 = vmatpush2.msra.mxu0 0.0
    %615 = vmatprep.subr.mxu0 0.0
    %616 = vmatpush2.msra.mxu0 0.0
    %617 = vmatprep.subr.mxu0 0.0
    %618 = vmatpush2.msra.mxu0 0.0
    %619 = vmatprep.subr.mxu0 0.0
    %620 = vmatpush2.msra.mxu0 0.0
    %621 = vmatprep.subr.mxu0 0.0
    %622 = vmatpush2.msra.mxu0 0.0
    %623 = vmatprep.subr.mxu0 0.0
    %624 = vmatpush2.msra.mxu0 0.0
    %625 = vmatprep.subr.mxu0 0.0
    %626 = vmatpush2.msra.mxu0 0.0
    %627 = vmatprep.subr.mxu0 0.0
    %628 = vmatpush2.msra.mxu0 0.0
    %629 = vmatprep.subr.mxu0 0.0
    %630 = vmatpush2.msra.mxu0 0.0
    %631 = vmatprep.subr.mxu0 0.0
    %632 = vmatpush2.msra.mxu0 0.0
    %633 = vmatprep.mubr.f32.mxu0 0.0
    %634 = vmatmul.mubr.f32.gmra.mxu0 %v474
    %v635 = vpop.f32.mrf.mxu0
    %v636 = vadd.f32 %v448, %v635
    %v637 = vpop.f32.mrf.mxu0
    %v638 = vadd.f32 %v452, %v637
    %639 = vdwg.mxu0
    %640 = vmatprep.subr.mxu0 0.0
    %641 = vmatpush1.msra.mxu0 0.0
    %642 = vmatprep.subr.mxu0 0.0
    %643 = vmatpush1.msra.mxu0 0.0
    %644 = vmatprep.subr.mxu0 0.0
    %645 = vmatpush1.msra.mxu0 0.0
    %646 = vmatprep.subr.mxu0 0.0
    %647 = vmatpush1.msra.mxu0 0.0
    %648 = vmatprep.subr.mxu0 0.0
    %649 = vmatpush1.msra.mxu0 0.0
    %650 = vmatprep.subr.mxu0 0.0
    %651 = vmatpush1.msra.mxu0 0.0
    %652 = vmatprep.subr.mxu0 0.0
    %653 = vmatpush1.msra.mxu0 0.0
    %654 = vmatprep.subr.mxu0 0.0
    %655 = vmatpush1.msra.mxu0 0.0
    %656 = vmatprep.subr.mxu0 0.0
    %657 = vmatpush1.msra.mxu0 0.0
    %658 = vmatprep.subr.mxu0 0.0
    %659 = vmatpush1.msra.mxu0 0.0
    %660 = vmatprep.subr.mxu0 0.0
    %661 = vmatpush1.msra.mxu0 0.0
    %662 = vmatprep.subr.mxu0 0.0
    %663 = vmatpush1.msra.mxu0 0.0
    %664 = vmatprep.subr.mxu0 %v493
    %665 = vmatpush1.msra.mxu0 %v490
    %666 = vmatprep.subr.mxu0 %v426
    %667 = vmatpush1.msra.mxu0 %v425
    %668 = vmatprep.subr.mxu0 %v419
    %669 = vmatpush1.msra.mxu0 %v418
    %670 = vmatprep.subr.mxu0 %v412
    %671 = vmatpush1.msra.mxu0 %v411
    %672 = vmatprep.subr.mxu0 0.0
    %673 = vmatpush2.msra.mxu0 0.0
    %674 = vmatprep.subr.mxu0 0.0
    %675 = vmatpush2.msra.mxu0 0.0
    %676 = vmatprep.subr.mxu0 0.0
    %677 = vmatpush2.msra.mxu0 0.0
    %678 = vmatprep.subr.mxu0 0.0
    %679 = vmatpush2.msra.mxu0 0.0
    %680 = vmatprep.subr.mxu0 0.0
    %681 = vmatpush2.msra.mxu0 0.0
    %682 = vmatprep.subr.mxu0 0.0
    %683 = vmatpush2.msra.mxu0 0.0
    %684 = vmatprep.subr.mxu0 0.0
    %685 = vmatpush2.msra.mxu0 0.0
    %686 = vmatprep.subr.mxu0 0.0
    %687 = vmatpush2.msra.mxu0 0.0
    %688 = vmatprep.subr.mxu0 0.0
    %689 = vmatpush2.msra.mxu0 0.0
    %690 = vmatprep.subr.mxu0 0.0
    %691 = vmatpush2.msra.mxu0 0.0
    %692 = vmatprep.subr.mxu0 0.0
    %693 = vmatpush2.msra.mxu0 0.0
    %694 = vmatprep.subr.mxu0 0.0
    %695 = vmatpush2.msra.mxu0 0.0
    %696 = vmatprep.subr.mxu0 0.0
    %697 = vmatpush2.msra.mxu0 0.0
    %698 = vmatprep.subr.mxu0 0.0
    %699 = vmatpush2.msra.mxu0 0.0
    %700 = vmatprep.subr.mxu0 0.0
    %701 = vmatpush2.msra.mxu0 0.0
    %702 = vmatprep.subr.mxu0 0.0
    %703 = vmatpush2.msra.mxu0 0.0
    %704 = vmatprep.mubr.f32.mxu0 0.0
    %705 = vmatmul.mubr.f32.gmra.mxu0 %v474
    %v706 = vpop.f32.mrf.mxu0
    %v707 = vadd.f32 %v456, %v706
    %v708 = vpop.f32.mrf.mxu0
    %v709 = vadd.f32 %v460, %v708
    %710 = vdwg.mxu0
    %711 = vmatprep.subr.mxu0 0.0
    %712 = vmatpush1.msra.mxu0 0.0
    %713 = vmatprep.subr.mxu0 0.0
    %714 = vmatpush1.msra.mxu0 0.0
    %715 = vmatprep.subr.mxu0 0.0
    %716 = vmatpush1.msra.mxu0 0.0
    %717 = vmatprep.subr.mxu0 0.0
    %718 = vmatpush1.msra.mxu0 0.0
    %719 = vmatprep.subr.mxu0 0.0
    %720 = vmatpush1.msra.mxu0 0.0
    %721 = vmatprep.subr.mxu0 0.0
    %722 = vmatpush1.msra.mxu0 0.0
    %723 = vmatprep.subr.mxu0 0.0
    %724 = vmatpush1.msra.mxu0 0.0
    %725 = vmatprep.subr.mxu0 0.0
    %726 = vmatpush1.msra.mxu0 0.0
    %727 = vmatprep.subr.mxu0 0.0
    %728 = vmatpush1.msra.mxu0 0.0
    %729 = vmatprep.subr.mxu0 0.0
    %730 = vmatpush1.msra.mxu0 0.0
    %731 = vmatprep.subr.mxu0 0.0
    %732 = vmatpush1.msra.mxu0 0.0
    %733 = vmatprep.subr.mxu0 0.0
    %734 = vmatpush1.msra.mxu0 0.0
    %735 = vmatprep.subr.mxu0 0.0
    %736 = vmatpush1.msra.mxu0 %v496
    %737 = vmatprep.subr.mxu0 0.0
    %738 = vmatpush1.msra.mxu0 %v427
    %739 = vmatprep.subr.mxu0 0.0
    %740 = vmatpush1.msra.mxu0 %v420
    %741 = vmatprep.subr.mxu0 0.0
    %742 = vmatpush1.msra.mxu0 %v413
    %743 = vmatprep.subr.mxu0 0.0
    %744 = vmatpush2.msra.mxu0 0.0
    %745 = vmatprep.subr.mxu0 0.0
    %746 = vmatpush2.msra.mxu0 0.0
    %747 = vmatprep.subr.mxu0 0.0
    %748 = vmatpush2.msra.mxu0 0.0
    %749 = vmatprep.subr.mxu0 0.0
    %750 = vmatpush2.msra.mxu0 0.0
    %751 = vmatprep.subr.mxu0 0.0
    %752 = vmatpush2.msra.mxu0 0.0
    %753 = vmatprep.subr.mxu0 0.0
    %754 = vmatpush2.msra.mxu0 0.0
    %755 = vmatprep.subr.mxu0 0.0
    %756 = vmatpush2.msra.mxu0 0.0
    %757 = vmatprep.subr.mxu0 0.0
    %758 = vmatpush2.msra.mxu0 0.0
    %759 = vmatprep.subr.mxu0 0.0
    %760 = vmatpush2.msra.mxu0 0.0
    %761 = vmatprep.subr.mxu0 0.0
    %762 = vmatpush2.msra.mxu0 0.0
    %763 = vmatprep.subr.mxu0 0.0
    %764 = vmatpush2.msra.mxu0 0.0
    %765 = vmatprep.subr.mxu0 0.0
    %766 = vmatpush2.msra.mxu0 0.0
    %767 = vmatprep.subr.mxu0 0.0
    %768 = vmatpush2.msra.mxu0 0.0
    %769 = vmatprep.subr.mxu0 0.0
    %770 = vmatpush2.msra.mxu0 0.0
    %771 = vmatprep.subr.mxu0 0.0
    %772 = vmatpush2.msra.mxu0 0.0
    %773 = vmatprep.subr.mxu0 0.0
    %774 = vmatpush2.msra.mxu0 0.0
    %775 = vmatprep.mubr.f32.mxu0 0.0
    %776 = vmatmul.mubr.f32.gmra.mxu0 %v474
    %v777 = vpop.f32.mrf.mxu0
    %v778 = vadd.f32 %v464, %v777
    %v779 = vpop.f32.mrf.mxu0
    %780 = vdwg.mxu0
    %781 = vst [vmem:[#allocation2] sm:$0xff] %v565
    %782 = vst [vmem:[#allocation2 + $0x8] sm:$0xff] %v567
    %783 = vst [vmem:[#allocation2 + $0x10] sm:$0xff] %v636
    %784 = vst [vmem:[#allocation2 + $0x18] sm:$0xff] %v638
    %785 = vst [vmem:[#allocation2 + $0x20] sm:$0xff] %v707
    %786 = vst [vmem:[#allocation2 + $0x28] sm:$0xff] %v709
    %787 = vst.msk [vmem:[#allocation2 + $0x30] sm:$0xff] %vm123, %v778
    // Predicated region
    $region18: #{tpu_custom_call.1} parent=1 // pred_check
      _
    $region19: #{tpu_custom_call.1} parent=1 // pred_check_branch
      %789 = sbr.rel (0) target = $region21
    $region20: #{tpu_custom_call.1} parent=1 // pred_region
      %s791 = ssub.s32 896, 896
      %792 = vsyncadd [#allocation3], %s791
      %s794 = sshll.u32 [#allocation2], 4
      %s795 = int_to_ptr.vmem [resolvable:$true] %s794
      %797 = dma.vmem_to_hbm [thread:$0]  %s795, 896, %s4, [#allocation3]
    $region21: #{tpu_custom_call.1} parent=1 // pred_fallthru
      _
    // Predicated region
    $region22: #{tpu_custom_call.1} parent=1 // pred_check
      _
    $region23: #{tpu_custom_call.1} parent=1 // pred_check_branch
      %799 = sbr.rel (0) target = $region25
    $region24: #{tpu_custom_call.1} parent=1 // pred_region
      %800 = dma.done [#allocation3], 896
    $region25: #{tpu_custom_call.1} parent=1 // pred_fallthru
      _
    %801 = vsyncpa [#allocation3], 1

</llo_original>
